<compile_context>
chip_gen: v7x
topology: tpu7x:2x2x1
jax: 0.10.0
libtpu: 0.0.40
codegen_flags: <defaults>
</compile_context>

<pallas_src>
import functools

import jax
import jax.numpy as jnp
from jax.experimental import pallas as pl
from jax.experimental.pallas import tpu as pltpu

_BN_EPS = 1e-5


def _round_up(x, m):
    return ((x + m - 1) // m) * m


def _make_mlp_kernel(num_layers, relu_first):
    """Build a fused MLP kernel body for a static layer count / relu order."""

    def kernel(*refs):
        x_ref = refs[0]
        o_ref = refs[-1]
        params = refs[1:-1]

        h = x_ref[...].astype(jnp.float32)  # (TN, C0_pad)
        idx = 0
        for l in range(num_layers):
            last = l == num_layers - 1
            w = params[idx][...]       # (Cin_pad, Cout_pad), already transposed
            b = params[idx + 1][...]   # (1, Cout_pad)
            idx += 2
            h = jnp.dot(h, w, preferred_element_type=jnp.float32) + b
            if not last:
                scale = params[idx][...]   # (1, Cout_pad)  gamma / sqrt(var+eps)
                shift = params[idx + 1][...]  # (1, Cout_pad) beta - mean*scale
                idx += 2
                if relu_first:
                    h = jnp.maximum(h, 0.0)
                    h = h * scale + shift
                else:
                    h = h * scale + shift
                    h = jnp.maximum(h, 0.0)
                # dropout: identity (p=0.0 default / eval mode)
        o_ref[...] = h.astype(o_ref.dtype)

    return kernel


def mlp_pallas(x, params, *, relu_first=False, tile_n=256, bn_eps=_BN_EPS):
    """Fused MLP forward.

    x:       [N, channel_list[0]] float32
    params:  dict with
             'weights': list of [Cout, Cin] (PyTorch layout),
             'biases':  list of [Cout],
             'bn':      list of (gamma, beta, running_mean, running_var) for
                        every layer except the last.
    """
    weights, biases, bn = params["weights"], params["biases"], params["bn"]
    num_layers = len(weights)
    n, c0 = x.shape
    assert c0 == weights[0].shape[1]

    # Lane-pad every feature dim to a multiple of 128 (lane-dense MXU + stores).
    dims = [c0] + [w.shape[0] for w in weights]
    dims_pad = [_round_up(d, 128) for d in dims]

    # Large row tile (default 256) but never bigger than the (8-rounded) batch.
    tn = max(8, min(int(tile_n), _round_up(n, 8)))
    tn = _round_up(tn, 8)
    n_pad = _round_up(n, tn)

    x_p = jnp.pad(
        x.astype(jnp.float32), ((0, n_pad - n), (0, dims_pad[0] - dims[0]))
    )

    flat_inputs = [x_p]
    in_specs = [pl.BlockSpec((tn, dims_pad[0]), lambda i: (i, 0))]

    for l in range(num_layers):
        cin, cout = dims[l], dims[l + 1]
        cin_p, cout_p = dims_pad[l], dims_pad[l + 1]

        w_t = jnp.pad(
            weights[l].T.astype(jnp.float32),
            ((0, cin_p - cin), (0, cout_p - cout)),
        )
        b = jnp.pad(biases[l].astype(jnp.float32), (0, cout_p - cout)).reshape(
            1, cout_p
        )
        flat_inputs += [w_t, b]
        in_specs += [
            pl.BlockSpec((cin_p, cout_p), lambda i: (0, 0)),  # resident weights
            pl.BlockSpec((1, cout_p), lambda i: (0, 0)),
        ]

        if l < num_layers - 1:
            gamma, beta, mean, var = bn[l]
            scale = gamma.astype(jnp.float32) / jnp.sqrt(
                var.astype(jnp.float32) + bn_eps
            )
            shift = beta.astype(jnp.float32) - mean.astype(jnp.float32) * scale
            scale = jnp.pad(scale, (0, cout_p - cout)).reshape(1, cout_p)
            shift = jnp.pad(shift, (0, cout_p - cout)).reshape(1, cout_p)
            flat_inputs += [scale, shift]
            in_specs += [
                pl.BlockSpec((1, cout_p), lambda i: (0, 0)),
                pl.BlockSpec((1, cout_p), lambda i: (0, 0)),
            ]

    out_pad = dims_pad[-1]
    kernel = _make_mlp_kernel(num_layers, relu_first)

    out = pl.pallas_call(
        kernel,
        out_shape=jax.ShapeDtypeStruct((n_pad, out_pad), jnp.float32),
        grid_spec=pltpu.PrefetchScalarGridSpec(
            num_scalar_prefetch=0,
            grid=(n_pad // tn,),
            in_specs=in_specs,
            out_specs=pl.BlockSpec((tn, out_pad), lambda i: (i, 0)),
        ),
        compiler_params=pltpu.CompilerParams(
            dimension_semantics=("parallel",),
        ),
    )(*flat_inputs)

    return out[:n, : dims[-1]]


# ---------------------------------------------------------------------------
# Parameter init (mirrors torch.nn.Linear / BatchNorm1d) and pure-JAX reference
# ---------------------------------------------------------------------------
def init_mlp_params(key, channel_list):
    num_layers = len(channel_list) - 1
    keys = jax.random.split(key, 3 * num_layers)
    weights, biases, bn = [], [], []
    for l in range(num_layers):
        cin, cout = channel_list[l], channel_list[l + 1]
        kw, kb, kn = keys[3 * l], keys[3 * l + 1], keys[3 * l + 2]
        bound_w = (6.0 / (cin + cout)) ** 0.5  # xavier_uniform_
        w = jax.random.uniform(kw, (cout, cin), jnp.float32, -bound_w, bound_w)
        bound_b = 1.0 / (cin ** 0.5)
        b = jax.random.uniform(kb, (cout,), jnp.float32, -bound_b, bound_b)
        weights.append(w)
        biases.append(b)
        if l < num_layers - 1:
            k1, k2, k3, k4 = jax.random.split(kn, 4)
            gamma = jax.random.uniform(k1, (cout,), jnp.float32, 0.5, 1.5)
            beta = 0.1 * jax.random.normal(k2, (cout,), jnp.float32)
            mean = 0.1 * jax.random.normal(k3, (cout,), jnp.float32)
            var = jax.random.uniform(k4, (cout,), jnp.float32, 0.5, 1.5)
            bn.append((gamma, beta, mean, var))
    return {"weights": weights, "biases": biases, "bn": bn}


def mlp_reference(x, params, *, relu_first=False, bn_eps=_BN_EPS):
    weights, biases, bn = params["weights"], params["biases"], params["bn"]
    h = x @ weights[0].T + biases[0]
    for l in range(1, len(weights)):
        gamma, beta, mean, var = bn[l - 1]
        if relu_first:
            h = jnp.maximum(h, 0.0)
        h = (h - mean) / jnp.sqrt(var + bn_eps) * gamma + beta
        if not relu_first:
            h = jnp.maximum(h, 0.0)
        # dropout: identity (p=0.0 / eval)
        h = h @ weights[l].T + biases[l]
    return h


if __name__ == "__main__":
    key = jax.random.PRNGKey(0)
    k_params, k_x = jax.random.split(key)

    # Small shapes consistent with the module: batch=64, channel_list=[32, 64, 32]
    channel_list = [32, 64, 32]
    batch = 64

    params = init_mlp_params(k_params, channel_list)
    x = jax.random.normal(k_x, (batch, channel_list[0]), jnp.float32)

    ok = True
    for relu_first in (False, True):
        out = mlp_pallas(x, params, relu_first=relu_first)
        jax.block_until_ready(out)
        ref = mlp_reference(x, params, relu_first=relu_first)
        assert out.shape == (batch, channel_list[-1])
        assert jnp.allclose(out, ref, atol=1e-4, rtol=1e-4), (
            f"mismatch vs reference (relu_first={relu_first})"
        )

    if ok:
        print("KERNEL_OK")
</pallas_src>

<mosaic_0001>
module attributes {stable_mosaic.version = 11 : i64} {
  func.func @kernel(%arg0: i32, %arg1: memref<64x128xf32, #tpu.memory_space<vmem>>, %arg2: memref<128x128xf32, #tpu.memory_space<vmem>>, %arg3: memref<1x128xf32, #tpu.memory_space<vmem>>, %arg4: memref<1x128xf32, #tpu.memory_space<vmem>>, %arg5: memref<1x128xf32, #tpu.memory_space<vmem>>, %arg6: memref<128x128xf32, #tpu.memory_space<vmem>>, %arg7: memref<1x128xf32, #tpu.memory_space<vmem>>, %arg8: memref<64x128xf32, #tpu.memory_space<vmem>>) attributes {dimension_semantics = [#tpu.dimension_semantics<parallel>], iteration_bounds = array<i64: 1>, scalar_prefetch = 0 : i64, scratch_operands = 0 : i64, tpu.core_type = #tpu.core_type<tc>, window_params = [{transform_indices = @transform_0, window_bounds = array<i64: 64, 128>}, {pipeline_mode = #tpu.pipeline_mode<synchronous>, transform_indices = @transform_1, window_bounds = array<i64: 128, 128>}, {pipeline_mode = #tpu.pipeline_mode<synchronous>, transform_indices = @transform_2, window_bounds = array<i64: 1, 128>}, {pipeline_mode = #tpu.pipeline_mode<synchronous>, transform_indices = @transform_3, window_bounds = array<i64: 1, 128>}, {pipeline_mode = #tpu.pipeline_mode<synchronous>, transform_indices = @transform_4, window_bounds = array<i64: 1, 128>}, {pipeline_mode = #tpu.pipeline_mode<synchronous>, transform_indices = @transform_5, window_bounds = array<i64: 128, 128>}, {pipeline_mode = #tpu.pipeline_mode<synchronous>, transform_indices = @transform_6, window_bounds = array<i64: 1, 128>}, {transform_indices = @transform_7, window_bounds = array<i64: 64, 128>}]} {
    %c0 = arith.constant 0 : index
    %c0_0 = arith.constant 0 : index
    %0 = vector.load %arg1[%c0, %c0_0] : memref<64x128xf32, #tpu.memory_space<vmem>>, vector<64x128xf32>
    %c0_1 = arith.constant 0 : index
    %c0_2 = arith.constant 0 : index
    %1 = vector.load %arg2[%c0_1, %c0_2] : memref<128x128xf32, #tpu.memory_space<vmem>>, vector<128x128xf32>
    %c0_3 = arith.constant 0 : index
    %c0_4 = arith.constant 0 : index
    %2 = vector.load %arg3[%c0_3, %c0_4] : memref<1x128xf32, #tpu.memory_space<vmem>>, vector<1x128xf32>
    %cst = arith.constant dense<0.000000e+00> : vector<64x128xf32>
    %3 = tpu.matmul %0, %1, %cst {dimension_numbers = #tpu.dot_dimension_numbers<[1], [0], [0], [1], [0, 0, 1, 1], [], []>} : vector<64x128xf32>, vector<128x128xf32>, vector<64x128xf32> -> vector<64x128xf32>
    %4 = vector.broadcast %2 : vector<1x128xf32> to vector<64x128xf32>
    %5 = arith.addf %3, %4 : vector<64x128xf32>
    %c0_5 = arith.constant 0 : index
    %c0_6 = arith.constant 0 : index
    %6 = vector.load %arg4[%c0_5, %c0_6] : memref<1x128xf32, #tpu.memory_space<vmem>>, vector<1x128xf32>
    %c0_7 = arith.constant 0 : index
    %c0_8 = arith.constant 0 : index
    %7 = vector.load %arg5[%c0_7, %c0_8] : memref<1x128xf32, #tpu.memory_space<vmem>>, vector<1x128xf32>
    %8 = vector.broadcast %6 : vector<1x128xf32> to vector<64x128xf32>
    %9 = arith.mulf %5, %8 : vector<64x128xf32>
    %10 = vector.broadcast %7 : vector<1x128xf32> to vector<64x128xf32>
    %11 = arith.addf %9, %10 : vector<64x128xf32>
    %cst_9 = arith.constant 0.000000e+00 : f32
    %12 = vector.broadcast %cst_9 : f32 to vector<64x128xf32>
    %13 = arith.maximumf %11, %12 : vector<64x128xf32>
    %c0_10 = arith.constant 0 : index
    %c0_11 = arith.constant 0 : index
    %14 = vector.load %arg6[%c0_10, %c0_11] : memref<128x128xf32, #tpu.memory_space<vmem>>, vector<128x128xf32>
    %c0_12 = arith.constant 0 : index
    %c0_13 = arith.constant 0 : index
    %15 = vector.load %arg7[%c0_12, %c0_13] : memref<1x128xf32, #tpu.memory_space<vmem>>, vector<1x128xf32>
    %cst_14 = arith.constant dense<0.000000e+00> : vector<64x128xf32>
    %16 = tpu.matmul %13, %14, %cst_14 {dimension_numbers = #tpu.dot_dimension_numbers<[1], [0], [0], [1], [0, 0, 1, 1], [], []>} : vector<64x128xf32>, vector<128x128xf32>, vector<64x128xf32> -> vector<64x128xf32>
    %17 = vector.broadcast %15 : vector<1x128xf32> to vector<64x128xf32>
    %18 = arith.addf %16, %17 : vector<64x128xf32>
    %c0_15 = arith.constant 0 : index
    %c0_16 = arith.constant 0 : index
    %19 = vector.load %arg8[%c0_15, %c0_16] : memref<64x128xf32, #tpu.memory_space<vmem>>, vector<64x128xf32>
    tpu.vector_store %arg8[%c0_15, %c0_16], %18 {strides = array<i32>} : memref<64x128xf32, #tpu.memory_space<vmem>>, vector<64x128xf32>,
    return
  }
  func.func @transform_0(%arg0: i32) -> (i32, i32) {
    %c0_i32 = arith.constant 0 : i32
    %c0_i32_0 = arith.constant 0 : i32
    return %arg0, %c0_i32 : i32, i32
  }
  func.func @transform_1(%arg0: i32) -> (i32, i32) {
    %c0_i32 = arith.constant 0 : i32
    %c0_i32_0 = arith.constant 0 : i32
    %c0_i32_1 = arith.constant 0 : i32
    return %c0_i32, %c0_i32_0 : i32, i32
  }
  func.func @transform_2(%arg0: i32) -> (i32, i32) {
    %c0_i32 = arith.constant 0 : i32
    %c0_i32_0 = arith.constant 0 : i32
    %c0_i32_1 = arith.constant 0 : i32
    return %c0_i32, %c0_i32_0 : i32, i32
  }
  func.func @transform_3(%arg0: i32) -> (i32, i32) {
    %c0_i32 = arith.constant 0 : i32
    %c0_i32_0 = arith.constant 0 : i32
    %c0_i32_1 = arith.constant 0 : i32
    return %c0_i32, %c0_i32_0 : i32, i32
  }
  func.func @transform_4(%arg0: i32) -> (i32, i32) {
    %c0_i32 = arith.constant 0 : i32
    %c0_i32_0 = arith.constant 0 : i32
    %c0_i32_1 = arith.constant 0 : i32
    return %c0_i32, %c0_i32_0 : i32, i32
  }
  func.func @transform_5(%arg0: i32) -> (i32, i32) {
    %c0_i32 = arith.constant 0 : i32
    %c0_i32_0 = arith.constant 0 : i32
    %c0_i32_1 = arith.constant 0 : i32
    return %c0_i32, %c0_i32_0 : i32, i32
  }
  func.func @transform_6(%arg0: i32) -> (i32, i32) {
    %c0_i32 = arith.constant 0 : i32
    %c0_i32_0 = arith.constant 0 : i32
    %c0_i32_1 = arith.constant 0 : i32
    return %c0_i32, %c0_i32_0 : i32, i32
  }
  func.func @transform_7(%arg0: i32) -> (i32, i32) {
    %c0_i32 = arith.constant 0 : i32
    %c0_i32_0 = arith.constant 0 : i32
    return %arg0, %c0_i32 : i32, i32
  }
}

</mosaic_0001>

<llo_original>
// kernel: tpu_custom_call.1
$region0: #{tpu_custom_call.1}
  #allocation0 [shape = 'u32[]', space=smem, size = 0x4, offset = 0x4, fixed_abs, tag = 'smem constant byte address 0x4 - core index']
  #allocation1 [shape = 'u32[144,128]{1,0:T(1,128)}', space=vmem, size = 0x12000, scoped, tag = 'internal scratch']
  %s0 = inlined_call_operand.hbm [shape: f32[64,128], index: 0, kind: input, shape index: {}]
  %s1 = inlined_call_operand.hbm [shape: f32[128,128], index: 1, kind: input, shape index: {}]
  %s2 = inlined_call_operand.vmem [shape: f32[1,128], index: 2, kind: input, shape index: {}]
  %s3 = inlined_call_operand.vmem [shape: f32[1,128], index: 3, kind: input, shape index: {}]
  %s4 = inlined_call_operand.vmem [shape: f32[1,128], index: 4, kind: input, shape index: {}]
  %s5 = inlined_call_operand.hbm [shape: f32[128,128], index: 5, kind: input, shape index: {}]
  %s6 = inlined_call_operand.vmem [shape: f32[1,128], index: 6, kind: input, shape index: {}]
  %s7 = inlined_call_operand.hbm [shape: f32[64,128], index: 7, kind: output, shape index: {}]
  %s8 = sld [smem:[#allocation0]]
  $region50: #{tpu_custom_call.1} parent=0
    _
  %s10 = ssub.s32 1, %s8
  %s11 = scalar_select 0, %s10, %s8
  $region1: #{tpu_custom_call.1} parent=0
    #allocation2 [shape = 'u8[32768]{0}', space=vmem, size = 0x8000, scoped, tag = 'input window, operand 0, single buffered']
    #allocation3 [shape = 's32[1]{0}', space=sflag, size = 0x4, scoped, tag = 'scoped memory for tpu_custom_call.1']
    #allocation4 [shape = 's32[1]{0}', space=sflag, size = 0x4, scoped, tag = 'scoped memory for tpu_custom_call.1']
    #allocation5 [shape = 'u8[65536]{0}', space=vmem, size = 0x10000, scoped, tag = 'input window, operand 1, single buffered']
    #allocation6 [shape = 's32[1]{0}', space=sflag, size = 0x4, scoped, tag = 'scoped memory for tpu_custom_call.1']
    #allocation7 [shape = 'u8[65536]{0}', space=vmem, size = 0x10000, scoped, tag = 'input window, operand 5, single buffered']
    #allocation8 [shape = 'u8[32768]{0}', space=vmem, size = 0x8000, scoped, tag = 'output window, operand 0, single buffered']
    %12 = vsyncpa [#allocation3], 0
    %13 = vsyncpa [#allocation6], 0
    %14 = vsyncpa [#allocation4], 0
    // Predicated region
    $region2: #{tpu_custom_call.1} parent=1 // pred_check
      _
    $region3: #{tpu_custom_call.1} parent=1 // pred_check_branch
      %16 = sbr.rel (0) target = $region5
    $region4: #{tpu_custom_call.1} parent=1 // pred_region
      %s18 = ssub.s32 1024, 1024
      %19 = vsyncadd [#allocation3], %s18
      %s20 = sshll.u32 [#allocation2], 4
      %s21 = int_to_ptr.vmem [resolvable:$true] %s20
      %26 = dma.hbm_to_vmem [thread:$0]  %s0, 1024, %s21, [#allocation3], 128, 128, 8
    $region5: #{tpu_custom_call.1} parent=1 // pred_fallthru
      _
    // Predicated region
    $region6: #{tpu_custom_call.1} parent=1 // pred_check
      _
    $region7: #{tpu_custom_call.1} parent=1 // pred_check_branch
      %28 = sbr.rel (0) target = $region9
    $region8: #{tpu_custom_call.1} parent=1 // pred_region
      %s30 = ssub.s32 2048, 2048
      %31 = vsyncadd [#allocation6], %s30
      %s32 = sshll.u32 [#allocation5], 4
      %s33 = int_to_ptr.vmem [resolvable:$true] %s32
      %38 = dma.hbm_to_vmem [thread:$0]  %s1, 2048, %s33, [#allocation6], 128, 128, 8
    $region9: #{tpu_custom_call.1} parent=1 // pred_fallthru
      _
    // Predicated region
    $region10: #{tpu_custom_call.1} parent=1 // pred_check
      _
    $region11: #{tpu_custom_call.1} parent=1 // pred_check_branch
      %40 = sbr.rel (0) target = $region13
    $region12: #{tpu_custom_call.1} parent=1 // pred_region
      _
    $region13: #{tpu_custom_call.1} parent=1 // pred_fallthru
      _
    // Predicated region
    $region14: #{tpu_custom_call.1} parent=1 // pred_check
      _
    $region15: #{tpu_custom_call.1} parent=1 // pred_check_branch
      %42 = sbr.rel (0) target = $region17
    $region16: #{tpu_custom_call.1} parent=1 // pred_region
      _
    $region17: #{tpu_custom_call.1} parent=1 // pred_fallthru
      _
    // Predicated region
    $region18: #{tpu_custom_call.1} parent=1 // pred_check
      _
    $region19: #{tpu_custom_call.1} parent=1 // pred_check_branch
      %44 = sbr.rel (0) target = $region21
    $region20: #{tpu_custom_call.1} parent=1 // pred_region
      _
    $region21: #{tpu_custom_call.1} parent=1 // pred_fallthru
      _
    // Predicated region
    $region22: #{tpu_custom_call.1} parent=1 // pred_check
      _
    $region23: #{tpu_custom_call.1} parent=1 // pred_check_branch
      %46 = sbr.rel (0) target = $region25
    $region24: #{tpu_custom_call.1} parent=1 // pred_region
      %s48 = ssub.s32 2048, 2048
      %49 = vsyncadd [#allocation6], %s48
      %s50 = sshll.u32 [#allocation7], 4
      %s51 = int_to_ptr.vmem [resolvable:$true] %s50
      %56 = dma.hbm_to_vmem [thread:$0]  %s5, 2048, %s51, [#allocation6], 128, 128, 8
    $region25: #{tpu_custom_call.1} parent=1 // pred_fallthru
      _
    // Predicated region
    $region26: #{tpu_custom_call.1} parent=1 // pred_check
      _
    $region27: #{tpu_custom_call.1} parent=1 // pred_check_branch
      %58 = sbr.rel (0) target = $region29
    $region28: #{tpu_custom_call.1} parent=1 // pred_region
      _
    $region29: #{tpu_custom_call.1} parent=1 // pred_fallthru
      _
    // Predicated region
    $region30: #{tpu_custom_call.1} parent=1 // pred_check
      _
    $region31: #{tpu_custom_call.1} parent=1 // pred_check_branch
      %60 = sbr.rel (0) target = $region33
    $region32: #{tpu_custom_call.1} parent=1 // pred_region
      %61 = dma.done [#allocation3], 1024
    $region33: #{tpu_custom_call.1} parent=1 // pred_fallthru
      _
    // Predicated region
    $region34: #{tpu_custom_call.1} parent=1 // pred_check
      _
    $region35: #{tpu_custom_call.1} parent=1 // pred_check_branch
      %63 = sbr.rel (0) target = $region37
    $region36: #{tpu_custom_call.1} parent=1 // pred_region
      %64 = dma.done [#allocation6], 2048
    $region37: #{tpu_custom_call.1} parent=1 // pred_fallthru
      _
    // Predicated region
    $region38: #{tpu_custom_call.1} parent=1 // pred_check
      _
    $region39: #{tpu_custom_call.1} parent=1 // pred_check_branch
      %66 = sbr.rel (0) target = $region41
    $region40: #{tpu_custom_call.1} parent=1 // pred_region
      %67 = dma.done [#allocation6], 2048
    $region41: #{tpu_custom_call.1} parent=1 // pred_fallthru
      _
    %v68 = vld [vmem:[#allocation2] sm:$0xff]
    %v69 = vld [vmem:[#allocation2 + $0x8] sm:$0xff]
    %v70 = vld [vmem:[#allocation2 + $0x10] sm:$0xff]
    %v71 = vld [vmem:[#allocation2 + $0x18] sm:$0xff]
    %v72 = vld [vmem:[#allocation2 + $0x20] sm:$0xff]
    %v73 = vld [vmem:[#allocation2 + $0x28] sm:$0xff]
    %v74 = vld [vmem:[#allocation2 + $0x30] sm:$0xff]
    %v75 = vld [vmem:[#allocation2 + $0x38] sm:$0xff]
    %v76 = vld [vmem:[#allocation5] sm:$0xff]
    %v77 = vld [vmem:[#allocation5 + $0x8] sm:$0xff]
    %v78 = vld [vmem:[#allocation5 + $0x10] sm:$0xff]
    %v79 = vld [vmem:[#allocation5 + $0x18] sm:$0xff]
    %v80 = vld [vmem:[#allocation5 + $0x20] sm:$0xff]
    %v81 = vld [vmem:[#allocation5 + $0x28] sm:$0xff]
    %v82 = vld [vmem:[#allocation5 + $0x30] sm:$0xff]
    %v83 = vld [vmem:[#allocation5 + $0x38] sm:$0xff]
    %v84 = vld [vmem:[#allocation5 + $0x40] sm:$0xff]
    %v85 = vld [vmem:[#allocation5 + $0x48] sm:$0xff]
    %v86 = vld [vmem:[#allocation5 + $0x50] sm:$0xff]
    %v87 = vld [vmem:[#allocation5 + $0x58] sm:$0xff]
    %v88 = vld [vmem:[#allocation5 + $0x60] sm:$0xff]
    %v89 = vld [vmem:[#allocation5 + $0x68] sm:$0xff]
    %v90 = vld [vmem:[#allocation5 + $0x70] sm:$0xff]
    %v91 = vld [vmem:[#allocation5 + $0x78] sm:$0xff]
    %v92 = vld [vmem:[%s2] sm:$0x1]
    %v94 = vlaneseq
    %v95 = vshrl.u32 %v94, 7
    %v96 = vsub.s32 0, %v95
    %v97 = vrot.slane %v92, %v96
    %99 = vmatprep.subr.mxu0 0.0
    %100 = vmatpush1.msra.mxu0 %v76
    %101 = vmatprep.subr.mxu0 0.0
    %102 = vmatpush1.msra.mxu0 %v77
    %103 = vmatprep.subr.mxu0 0.0
    %104 = vmatpush1.msra.mxu0 %v78
    %105 = vmatprep.subr.mxu0 0.0
    %106 = vmatpush1.msra.mxu0 %v79
    %107 = vmatprep.subr.mxu0 0.0
    %108 = vmatpush1.msra.mxu0 %v80
    %109 = vmatprep.subr.mxu0 0.0
    %110 = vmatpush1.msra.mxu0 %v81
    %111 = vmatprep.subr.mxu0 0.0
    %112 = vmatpush1.msra.mxu0 %v82
    %113 = vmatprep.subr.mxu0 0.0
    %114 = vmatpush1.msra.mxu0 %v83
    %115 = vmatprep.subr.mxu0 0.0
    %116 = vmatpush1.msra.mxu0 %v84
    %117 = vmatprep.subr.mxu0 0.0
    %118 = vmatpush1.msra.mxu0 %v85
    %119 = vmatprep.subr.mxu0 0.0
    %120 = vmatpush1.msra.mxu0 %v86
    %121 = vmatprep.subr.mxu0 0.0
    %122 = vmatpush1.msra.mxu0 %v87
    %123 = vmatprep.subr.mxu0 0.0
    %124 = vmatpush1.msra.mxu0 %v88
    %125 = vmatprep.subr.mxu0 0.0
    %126 = vmatpush1.msra.mxu0 %v89
    %127 = vmatprep.subr.mxu0 0.0
    %128 = vmatpush1.msra.mxu0 %v90
    %129 = vmatprep.subr.mxu0 0.0
    %130 = vmatpush1.msra.mxu0 %v91
    %131 = vmatprep.subr.mxu0 0.0
    %132 = vmatpush1.msra.mxu0 0.0
    %133 = vmatprep.subr.mxu0 0.0
    %134 = vmatpush1.msra.mxu0 0.0
    %135 = vmatprep.subr.mxu0 0.0
    %136 = vmatpush1.msra.mxu0 0.0
    %137 = vmatprep.subr.mxu0 0.0
    %138 = vmatpush1.msra.mxu0 0.0
    %139 = vmatprep.subr.mxu0 0.0
    %140 = vmatpush1.msra.mxu0 0.0
    %141 = vmatprep.subr.mxu0 0.0
    %142 = vmatpush1.msra.mxu0 0.0
    %143 = vmatprep.subr.mxu0 0.0
    %144 = vmatpush1.msra.mxu0 0.0
    %145 = vmatprep.subr.mxu0 0.0
    %146 = vmatpush1.msra.mxu0 0.0
    %147 = vmatprep.subr.mxu0 0.0
    %148 = vmatpush1.msra.mxu0 0.0
    %149 = vmatprep.subr.mxu0 0.0
    %150 = vmatpush1.msra.mxu0 0.0
    %151 = vmatprep.subr.mxu0 0.0
    %152 = vmatpush1.msra.mxu0 0.0
    %153 = vmatprep.subr.mxu0 0.0
    %154 = vmatpush1.msra.mxu0 0.0
    %155 = vmatprep.subr.mxu0 0.0
    %156 = vmatpush1.msra.mxu0 0.0
    %157 = vmatprep.subr.mxu0 0.0
    %158 = vmatpush1.msra.mxu0 0.0
    %159 = vmatprep.subr.mxu0 0.0
    %160 = vmatpush1.msra.mxu0 0.0
    %161 = vmatprep.subr.mxu0 0.0
    %162 = vmatpush1.msra.mxu0 0.0
    %163 = vmatprep.mubr.f32.mxu0 0.0
    %164 = vmatmul.mubr.f32.gmra.mrb[0].mxu0 %v68
    %v165 = vpop.f32.mrb[0].mxu0
    %v166 = vadd.f32 %v97, %v165
    %v167 = vpop.f32.mrb[0].mxu0
    %168 = vmatprep.mubr.f32.mxu0 0.0
    %169 = vmatmul.mubr.f32.gmra.mrb[0].mxu0 %v69
    %v170 = vpop.f32.mrb[0].mxu0
    %v171 = vadd.f32 %v97, %v170
    %v172 = vpop.f32.mrb[0].mxu0
    %173 = vmatprep.mubr.f32.mxu0 0.0
    %174 = vmatmul.mubr.f32.gmra.mrb[0].mxu0 %v70
    %v175 = vpop.f32.mrb[0].mxu0
    %v176 = vadd.f32 %v97, %v175
    %v177 = vpop.f32.mrb[0].mxu0
    %178 = vmatprep.mubr.f32.mxu0 0.0
    %179 = vmatmul.mubr.f32.gmra.mrb[0].mxu0 %v71
    %v180 = vpop.f32.mrb[0].mxu0
    %v181 = vadd.f32 %v97, %v180
    %v182 = vpop.f32.mrb[0].mxu0
    %183 = vmatprep.mubr.f32.mxu0 0.0
    %184 = vmatmul.mubr.f32.gmra.mrb[0].mxu0 %v72
    %v185 = vpop.f32.mrb[0].mxu0
    %v186 = vadd.f32 %v97, %v185
    %v187 = vpop.f32.mrb[0].mxu0
    %188 = vmatprep.mubr.f32.mxu0 0.0
    %189 = vmatmul.mubr.f32.gmra.mrb[0].mxu0 %v73
    %v190 = vpop.f32.mrb[0].mxu0
    %v191 = vadd.f32 %v97, %v190
    %v192 = vpop.f32.mrb[0].mxu0
    %193 = vmatprep.mubr.f32.mxu0 0.0
    %194 = vmatmul.mubr.f32.gmra.mrb[0].mxu0 %v74
    %v195 = vpop.f32.mrb[0].mxu0
    %v196 = vadd.f32 %v97, %v195
    %v197 = vpop.f32.mrb[0].mxu0
    %198 = vmatprep.mubr.f32.mxu0 0.0
    %199 = vmatmul.mubr.f32.gmra.mrb[0].mxu0 %v75
    %v200 = vpop.f32.mrb[0].mxu0
    %v201 = vadd.f32 %v97, %v200
    %v202 = vpop.f32.mrb[0].mxu0
    %203 = vdwg.mxu0
    %v204 = vld [vmem:[%s3] sm:$0x1]
    %v205 = vld [vmem:[%s4] sm:$0x1]
    %v207 = vlaneseq
    %v208 = vshrl.u32 %v207, 7
    %v209 = vsub.s32 0, %v208
    %v210 = vrot.slane %v204, %v209
    %v212 = vmul.f32 %v166, %v210
    %v213 = vmul.f32 %v171, %v210
    %v214 = vmul.f32 %v176, %v210
    %v215 = vmul.f32 %v181, %v210
    %v216 = vmul.f32 %v186, %v210
    %v217 = vmul.f32 %v191, %v210
    %v218 = vmul.f32 %v196, %v210
    %v219 = vmul.f32 %v201, %v210
    %v221 = vlaneseq
    %v222 = vshrl.u32 %v221, 7
    %v223 = vsub.s32 0, %v222
    %v224 = vrot.slane %v205, %v223
    %v226 = vadd.f32 %v212, %v224
    %v227 = vadd.f32 %v213, %v224
    %v228 = vadd.f32 %v214, %v224
    %v229 = vadd.f32 %v215, %v224
    %v230 = vadd.f32 %v216, %v224
    %v231 = vadd.f32 %v217, %v224
    %v232 = vadd.f32 %v218, %v224
    %v233 = vadd.f32 %v219, %v224
    %v234 = vmax.f32 %v226, 0.0
    %v235 = vmax.f32 %v227, 0.0
    %v236 = vmax.f32 %v228, 0.0
    %v237 = vmax.f32 %v229, 0.0
    %v238 = vmax.f32 %v230, 0.0
    %v239 = vmax.f32 %v231, 0.0
    %v240 = vmax.f32 %v232, 0.0
    %v241 = vmax.f32 %v233, 0.0
    %v242 = vld [vmem:[#allocation7] sm:$0xff]
    %v243 = vld [vmem:[#allocation7 + $0x8] sm:$0xff]
    %v244 = vld [vmem:[#allocation7 + $0x10] sm:$0xff]
    %v245 = vld [vmem:[#allocation7 + $0x18] sm:$0xff]
    %v246 = vld [vmem:[#allocation7 + $0x20] sm:$0xff]
    %v247 = vld [vmem:[#allocation7 + $0x28] sm:$0xff]
    %v248 = vld [vmem:[#allocation7 + $0x30] sm:$0xff]
    %v249 = vld [vmem:[#allocation7 + $0x38] sm:$0xff]
    %v250 = vld [vmem:[#allocation7 + $0x40] sm:$0xff]
    %v251 = vld [vmem:[#allocation7 + $0x48] sm:$0xff]
    %v252 = vld [vmem:[#allocation7 + $0x50] sm:$0xff]
    %v253 = vld [vmem:[#allocation7 + $0x58] sm:$0xff]
    %v254 = vld [vmem:[#allocation7 + $0x60] sm:$0xff]
    %v255 = vld [vmem:[#allocation7 + $0x68] sm:$0xff]
    %v256 = vld [vmem:[#allocation7 + $0x70] sm:$0xff]
    %v257 = vld [vmem:[#allocation7 + $0x78] sm:$0xff]
    %v258 = vld [vmem:[%s6] sm:$0x1]
    %v260 = vlaneseq
    %v261 = vshrl.u32 %v260, 7
    %v262 = vsub.s32 0, %v261
    %v263 = vrot.slane %v258, %v262
    %265 = vmatprep.subr.mxu0 0.0
    %266 = vmatpush1.msra.mxu0 %v242
    %267 = vmatprep.subr.mxu0 0.0
    %268 = vmatpush1.msra.mxu0 %v243
    %269 = vmatprep.subr.mxu0 0.0
    %270 = vmatpush1.msra.mxu0 %v244
    %271 = vmatprep.subr.mxu0 0.0
    %272 = vmatpush1.msra.mxu0 %v245
    %273 = vmatprep.subr.mxu0 0.0
    %274 = vmatpush1.msra.mxu0 %v246
    %275 = vmatprep.subr.mxu0 0.0
    %276 = vmatpush1.msra.mxu0 %v247
    %277 = vmatprep.subr.mxu0 0.0
    %278 = vmatpush1.msra.mxu0 %v248
    %279 = vmatprep.subr.mxu0 0.0
    %280 = vmatpush1.msra.mxu0 %v249
    %281 = vmatprep.subr.mxu0 0.0
    %282 = vmatpush1.msra.mxu0 %v250
    %283 = vmatprep.subr.mxu0 0.0
    %284 = vmatpush1.msra.mxu0 %v251
    %285 = vmatprep.subr.mxu0 0.0
    %286 = vmatpush1.msra.mxu0 %v252
    %287 = vmatprep.subr.mxu0 0.0
    %288 = vmatpush1.msra.mxu0 %v253
    %289 = vmatprep.subr.mxu0 0.0
    %290 = vmatpush1.msra.mxu0 %v254
    %291 = vmatprep.subr.mxu0 0.0
    %292 = vmatpush1.msra.mxu0 %v255
    %293 = vmatprep.subr.mxu0 0.0
    %294 = vmatpush1.msra.mxu0 %v256
    %295 = vmatprep.subr.mxu0 0.0
    %296 = vmatpush1.msra.mxu0 %v257
    %297 = vmatprep.subr.mxu0 0.0
    %298 = vmatpush1.msra.mxu0 0.0
    %299 = vmatprep.subr.mxu0 0.0
    %300 = vmatpush1.msra.mxu0 0.0
    %301 = vmatprep.subr.mxu0 0.0
    %302 = vmatpush1.msra.mxu0 0.0
    %303 = vmatprep.subr.mxu0 0.0
    %304 = vmatpush1.msra.mxu0 0.0
    %305 = vmatprep.subr.mxu0 0.0
    %306 = vmatpush1.msra.mxu0 0.0
    %307 = vmatprep.subr.mxu0 0.0
    %308 = vmatpush1.msra.mxu0 0.0
    %309 = vmatprep.subr.mxu0 0.0
    %310 = vmatpush1.msra.mxu0 0.0
    %311 = vmatprep.subr.mxu0 0.0
    %312 = vmatpush1.msra.mxu0 0.0
    %313 = vmatprep.subr.mxu0 0.0
    %314 = vmatpush1.msra.mxu0 0.0
    %315 = vmatprep.subr.mxu0 0.0
    %316 = vmatpush1.msra.mxu0 0.0
    %317 = vmatprep.subr.mxu0 0.0
    %318 = vmatpush1.msra.mxu0 0.0
    %319 = vmatprep.subr.mxu0 0.0
    %320 = vmatpush1.msra.mxu0 0.0
    %321 = vmatprep.subr.mxu0 0.0
    %322 = vmatpush1.msra.mxu0 0.0
    %323 = vmatprep.subr.mxu0 0.0
    %324 = vmatpush1.msra.mxu0 0.0
    %325 = vmatprep.subr.mxu0 0.0
    %326 = vmatpush1.msra.mxu0 0.0
    %327 = vmatprep.subr.mxu0 0.0
    %328 = vmatpush1.msra.mxu0 0.0
    %329 = vmatprep.mubr.f32.mxu0 0.0
    %330 = vmatmul.mubr.f32.gmra.mrb[0].mxu0 %v234
    %v331 = vpop.f32.mrb[0].mxu0
    %v332 = vadd.f32 %v263, %v331
    %v333 = vpop.f32.mrb[0].mxu0
    %334 = vmatprep.mubr.f32.mxu0 0.0
    %335 = vmatmul.mubr.f32.gmra.mrb[0].mxu0 %v235
    %v336 = vpop.f32.mrb[0].mxu0
    %v337 = vadd.f32 %v263, %v336
    %v338 = vpop.f32.mrb[0].mxu0
    %339 = vmatprep.mubr.f32.mxu0 0.0
    %340 = vmatmul.mubr.f32.gmra.mrb[0].mxu0 %v236
    %v341 = vpop.f32.mrb[0].mxu0
    %v342 = vadd.f32 %v263, %v341
    %v343 = vpop.f32.mrb[0].mxu0
    %344 = vmatprep.mubr.f32.mxu0 0.0
    %345 = vmatmul.mubr.f32.gmra.mrb[0].mxu0 %v237
    %v346 = vpop.f32.mrb[0].mxu0
    %v347 = vadd.f32 %v263, %v346
    %v348 = vpop.f32.mrb[0].mxu0
    %349 = vmatprep.mubr.f32.mxu0 0.0
    %350 = vmatmul.mubr.f32.gmra.mrb[0].mxu0 %v238
    %v351 = vpop.f32.mrb[0].mxu0
    %v352 = vadd.f32 %v263, %v351
    %v353 = vpop.f32.mrb[0].mxu0
    %354 = vmatprep.mubr.f32.mxu0 0.0
    %355 = vmatmul.mubr.f32.gmra.mrb[0].mxu0 %v239
    %v356 = vpop.f32.mrb[0].mxu0
    %v357 = vadd.f32 %v263, %v356
    %v358 = vpop.f32.mrb[0].mxu0
    %359 = vmatprep.mubr.f32.mxu0 0.0
    %360 = vmatmul.mubr.f32.gmra.mrb[0].mxu0 %v240
    %v361 = vpop.f32.mrb[0].mxu0
    %v362 = vadd.f32 %v263, %v361
    %v363 = vpop.f32.mrb[0].mxu0
    %364 = vmatprep.mubr.f32.mxu0 0.0
    %365 = vmatmul.mubr.f32.gmra.mrb[0].mxu0 %v241
    %v366 = vpop.f32.mrb[0].mxu0
    %v367 = vadd.f32 %v263, %v366
    %v368 = vpop.f32.mrb[0].mxu0
    %369 = vdwg.mxu0
    %370 = vst [vmem:[#allocation8] sm:$0xff] %v332
    %371 = vst [vmem:[#allocation8 + $0x8] sm:$0xff] %v337
    %372 = vst [vmem:[#allocation8 + $0x10] sm:$0xff] %v342
    %373 = vst [vmem:[#allocation8 + $0x18] sm:$0xff] %v347
    %374 = vst [vmem:[#allocation8 + $0x20] sm:$0xff] %v352
    %375 = vst [vmem:[#allocation8 + $0x28] sm:$0xff] %v357
    %376 = vst [vmem:[#allocation8 + $0x30] sm:$0xff] %v362
    %377 = vst [vmem:[#allocation8 + $0x38] sm:$0xff] %v367
    // Predicated region
    $region42: #{tpu_custom_call.1} parent=1 // pred_check
      _
    $region43: #{tpu_custom_call.1} parent=1 // pred_check_branch
      %379 = sbr.rel (0) target = $region45
    $region44: #{tpu_custom_call.1} parent=1 // pred_region
      %s381 = ssub.s32 1024, 1024
      %382 = vsyncadd [#allocation4], %s381
      %s383 = sshll.u32 [#allocation8], 4
      %s384 = int_to_ptr.vmem [resolvable:$true] %s383
      %389 = dma.vmem_to_hbm [thread:$0]  %s384, 1024, %s7, [#allocation4], 128, 128, 8
    $region45: #{tpu_custom_call.1} parent=1 // pred_fallthru
      _
    // Predicated region
    $region46: #{tpu_custom_call.1} parent=1 // pred_check
      _
    $region47: #{tpu_custom_call.1} parent=1 // pred_check_branch
      %391 = sbr.rel (0) target = $region49
    $region48: #{tpu_custom_call.1} parent=1 // pred_region
      %392 = dma.done [#allocation4], 1024
    $region49: #{tpu_custom_call.1} parent=1 // pred_fallthru
      _
    %393 = vsyncpa [#allocation3], 1
    %394 = vsyncpa [#allocation6], 1
    %395 = vsyncpa [#allocation4], 1

</llo_original>
